<compile_context>
chip_gen: v5e
topology: v5e:2x2
jax: 0.10.0
libtpu: 0.0.40
codegen_flags: <defaults>
</compile_context>

<pallas_src>
import functools

import numpy as np
import jax
import jax.numpy as jnp
from jax import lax
from jax.experimental import pallas as pl
from jax.experimental.pallas import tpu as pltpu

BF16 = jnp.bfloat16
EPS = 1e-5


# ----------------------------------------------------------------------------
# Host-side geometry constants (masks / small 0-1 lane-permutation operators)
# ----------------------------------------------------------------------------
def _tap_offsets(KH, KW, pad):
    return [(kh - pad, kw - pad) for kh in range(KH) for kw in range(KW)]


def _bounds_mask(H, W, offsets):
    """(K, 1, H*W) 0/1: 1 where tap (dh, dw) reads inside the (zero-padded) input."""
    K = len(offsets)
    m = np.zeros((K, 1, H * W), np.float32)
    for k, (dh, dw) in enumerate(offsets):
        for h in range(H):
            if not 0 <= h + dh < H:
                continue
            for w in range(W):
                if 0 <= w + dw < W:
                    m[k, 0, h * W + w] = 1.0
    return m


def _tile_mask(m, B):
    return np.concatenate([m] * B, axis=2)          # (K, 1, B*H*W)


def _subsample_op(H, W):
    """(H*W, (H/2)*(W/2)) 0/1: select even rows & even cols (stride-2 output positions)."""
    Ho, Wo = H // 2, W // 2
    S = np.zeros((H * W, Ho * Wo), np.float32)
    for ho in range(Ho):
        for wo in range(Wo):
            S[(2 * ho) * W + 2 * wo, ho * Wo + wo] = 1.0
    return S


def _upsample_op(H, W):
    """(H*W, 4*H*W) 0/1: 2x nearest-neighbour upsample."""
    Hu, Wu = 2 * H, 2 * W
    U = np.zeros((H * W, Hu * Wu), np.float32)
    for hh in range(Hu):
        for wh in range(Wu):
            U[(hh // 2) * W + wh // 2, hh * Wu + wh] = 1.0
    return U


def _conv_taps(H, W, KH, KW, stride, pad):
    """(K, P_in, P_out) 0/1 per-tap operators with stride + zero-padding folded in."""
    Ho = (H + 2 * pad - KH) // stride + 1
    Wo = (W + 2 * pad - KW) // stride + 1
    A = np.zeros((KH * KW, H * W, Ho * Wo), np.float32)
    for kh in range(KH):
        for kw in range(KW):
            k = kh * KW + kw
            for ho in range(Ho):
                ih = ho * stride + kh - pad
                if not 0 <= ih < H:
                    continue
                for wo in range(Wo):
                    iw = wo * stride + kw - pad
                    if 0 <= iw < W:
                        A[k, ih * W + iw, ho * Wo + wo] = 1.0
    return A


def _upconv_taps(H, W, KH=3, KW=3, pad=1):
    """Like _conv_taps, with a 2x nearest upsample folded in front of the 3x3 conv."""
    Hu, Wu = 2 * H, 2 * W
    Ho, Wo = Hu + 2 * pad - KH + 1, Wu + 2 * pad - KW + 1
    A = np.zeros((KH * KW, H * W, Ho * Wo), np.float32)
    for kh in range(KH):
        for kw in range(KW):
            k = kh * KW + kw
            for ho in range(Ho):
                ih = ho + kh - pad
                if not 0 <= ih < Hu:
                    continue
                for wo in range(Wo):
                    iw = wo + kw - pad
                    if 0 <= iw < Wu:
                        A[k, (ih // 2) * W + iw // 2, ho * Wo + wo] = 1.0
    return A


def _block_diag(a, B):
    K, pin, pout = a.shape
    out = np.zeros((K, B * pin, B * pout), a.dtype)
    for b in range(B):
        out[:, b * pin:(b + 1) * pin, b * pout:(b + 1) * pout] = a
    return out


# ----------------------------------------------------------------------------
# Roll-direction probe (tiny pallas_call, run once, outside jit)
# ----------------------------------------------------------------------------
def _detect_roll_sign():
    """Return s such that pltpu.roll(x, s*o, axis=1)[..., l] == x[..., (l + o) % n]."""
    def probe(x_ref, o_ref):
        o_ref[...] = pltpu.roll(x_ref[...], 1, axis=1)

    x = jnp.tile(jnp.arange(128, dtype=jnp.float32)[None, :], (8, 1))
    y = pl.pallas_call(probe, out_shape=jax.ShapeDtypeStruct((8, 128), jnp.float32))(x)
    first = int(jax.device_get(y[0, 0]))
    if first == 1:          # roll(x, s)[l] == x[l + s]
        return 1
    return -1               # jnp.roll convention: roll(x, s)[l] == x[l - s]


# ----------------------------------------------------------------------------
# Shared small ops
# ----------------------------------------------------------------------------
def _prelu(x, a):
    return jnp.where(x >= 0.0, x, a * x)


def _const_index_map(ndim):
    def imap(g):
        return (0,) * ndim
    return imap


# ----------------------------------------------------------------------------
# Config / parameter packing
# ----------------------------------------------------------------------------
def make_config(input_nc, ngf, H, W, B, roll_sign):
    assert H % 16 == 0 and W % 16 == 0, "4 stride-2 levels require H, W multiples of 16"
    HW = [(H >> i, W >> i) for i in range(5)]
    P = [h * w for h, w in HW]
    cfg = dict(input_nc=input_nc, ngf=ngf, B=B, roll_sign=roll_sign, HW=HW, P=P)
    cfg["off3_0"] = [dh * W + dw for dh, dw in _tap_offsets(3, 3, 1)]
    cfg["off4_0"] = [dh * W + dw for dh, dw in _tap_offsets(4, 4, 1)]
    cfg["off4_1"] = [dh * (W // 2) + dw for dh, dw in _tap_offsets(4, 4, 1)]
    cfg["off3_1"] = [dh * (W // 2) + dw for dh, dw in _tap_offsets(3, 3, 1)]

    # rough cost estimate (per grid step) for XLA scheduling
    C = input_nc
    P0, P1, P2, P3, P4 = P
    wmac = (ngf * 9 * C * P0 + ngf * 16 * ngf * P0 + 2 * ngf * 16 * ngf * P1
            + 4 * ngf * 16 * 2 * ngf * P3 + 8 * ngf * 16 * 4 * ngf * P4
            + 4 * ngf * 9 * 8 * ngf * P3 + 2 * ngf * 9 * 8 * ngf * P2
            + ngf * 9 * 4 * ngf * P1 + ngf * 9 * 2 * ngf * P0 + C * 9 * ngf * P0) * B
    omac = (ngf * P0 * P1 + 2 * ngf * P1 * P2 + 4 * ngf * P2 * P1
            + 2 * ngf * P1 * P0) * B
    omac += (16 * 2 * ngf * P2 * P3 + 16 * 4 * ngf * P3 * P4
             + 9 * 8 * ngf * P4 * P3 + 9 * 8 * ngf * P3 * P2) * B * B
    cfg["flops_per_group"] = int(2 * (wmac + omac))
    cfg["transcendentals_per_group"] = int(B * C * P0)
    return cfg


def _packw(w):
    """PyTorch (Cout, Cin, KH, KW) -> (Cout, KH*KW*Cin), column = k*Cin + cin, bf16."""
    co, ci, kh, kw = w.shape
    return jnp.asarray(jnp.transpose(w, (0, 2, 3, 1)).reshape(co, kh * kw * ci), BF16)


def _packb(b):
    return jnp.asarray(b.reshape(-1, 1), jnp.float32)


def pack_params(p, cfg):
    B = cfg["B"]
    (H0, W0), (H1, W1), (H2, W2), (H3, W3), (H4, W4) = cfg["HW"]
    b0, b1, b2, b3 = p["b0"], p["b1"], p["b2"], p["b3"]

    def bf(a):
        return jnp.asarray(a, BF16)

    def f32(a):
        return jnp.asarray(a, jnp.float32)

    # boundary masks (f32: multiplied against f32 rolled activations)
    m3_0 = f32(_tile_mask(_bounds_mask(H0, W0, _tap_offsets(3, 3, 1)), B))
    m4_0 = f32(_tile_mask(_bounds_mask(H0, W0, _tap_offsets(4, 4, 1)), B))
    m4_1 = f32(_tile_mask(_bounds_mask(H1, W1, _tap_offsets(4, 4, 1)), B))
    m3_1 = f32(_tile_mask(_bounds_mask(H1, W1, _tap_offsets(3, 3, 1)), B))

    # per-sample 0/1 lane-permutation operators (exact in bf16)
    s_0 = bf(_subsample_op(H0, W0))                  # (P0, P1)
    s_1 = bf(_subsample_op(H1, W1))                  # (P1, P2)
    u_1 = bf(_upsample_op(H1, W1))                   # (P1, P0)
    u_2 = bf(_upsample_op(H2, W2))                   # (P2, P1)

    # tiny innermost levels keep the folded per-tap operators (block-diag over batch)
    a_d2 = bf(_block_diag(_conv_taps(H2, W2, 4, 4, 2, 1), B))
    a_d3 = bf(_block_diag(_conv_taps(H3, W3, 4, 4, 2, 1), B))
    a_u3 = bf(_block_diag(_upconv_taps(H4, W4), B))
    a_u2 = bf(_block_diag(_upconv_taps(H3, W3), B))

    params = [
        _packw(b0["c1_w"]), _packb(b0["c1_b"]),
        _packw(b0["c2_w"]), _packb(b0["c2_b"]),
        _packw(b1["down_w"]), _packb(b1["down_b"]),
        _packw(b2["down_w"]), _packb(b2["down_b"]),
        _packw(b3["down_w"]), _packb(b3["down_b"]),
        _packw(b3["up_w"]), _packb(b3["up_b"]),
        _packw(b2["up_w"]), _packb(b2["up_b"]),
        _packw(b1["up_w"]), _packb(b1["up_b"]),
        _packw(b0["cu_w"]), _packb(b0["cu_b"]),
        _packw(b0["cu2_w"]), _packb(b0["cu2_b"]),
        m3_0, m4_0, m4_1, m3_1,
        s_0, s_1, u_1, u_2,
        a_d2, a_d3, a_u3, a_u2,
    ]
    assert len(params) == 32
    alphas = jnp.concatenate(
        [p[k]["alpha"] for k in ("b0", "b1", "b2", "b3")]).astype(jnp.float32)
    return alphas, params


# ----------------------------------------------------------------------------
# Fused kernel
# ----------------------------------------------------------------------------
def _build_kernel(cfg):
    B = cfg["B"]
    sign = cfg["roll_sign"]
    P0, P1, P2, P3, P4 = cfg["P"]
    off3_0, off4_0 = cfg["off3_0"], cfg["off4_0"]
    off4_1, off3_1 = cfg["off4_1"], cfg["off3_1"]

    def roll_taps(x_f32, mask_ref, offs):
        """9/16 masked lane-shifted copies, stacked along channels, cast to bf16."""
        n = x_f32.shape[1]
        taps = []
        for k, o in enumerate(offs):
            s = (sign * o) % n
            t = x_f32 if s == 0 else pltpu.roll(x_f32, s, axis=1)
            taps.append(t * mask_ref[k])
        return jnp.concatenate(taps, axis=0).astype(BF16)

    def op_taps(x_bf, a_ref, K):
        """Tiny inner levels: per-tap 0/1 operator (stride / upsample folded), stacked."""
        taps = [jnp.dot(x_bf, a_ref[k], preferred_element_type=jnp.float32)
                for k in range(K)]
        return jnp.concatenate(taps, axis=0).astype(BF16)

    def wmm(w_ref, taps):
        return jnp.dot(w_ref[...], taps, preferred_element_type=jnp.float32)

    def per_sample_mm(x_bf, op_ref, p_in):
        """Apply a per-sample (p_in, p_out) 0/1 operator to (C, B*p_in) lanes."""
        op = op_ref[...]
        if B == 1:
            return jnp.dot(x_bf, op, preferred_element_type=jnp.float32)
        parts = [jnp.dot(x_bf[:, b * p_in:(b + 1) * p_in], op,
                         preferred_element_type=jnp.float32) for b in range(B)]
        return jnp.concatenate(parts, axis=1)

    def inorm(x, P):
        """InstanceNorm2d(affine=False) per sample on (C, B*P): segmented lane reduce."""
        n = x.shape[1]
        lane = lax.broadcasted_iota(jnp.int32, (1, n), 1)
        out = jnp.zeros_like(x)
        inv = 1.0 / P
        for b in range(B):
            m = ((lane >= b * P) & (lane < (b + 1) * P)).astype(x.dtype)
            mean = jnp.sum(x * m, axis=1, keepdims=True) * inv
            diff = (x - mean) * m
            var = jnp.sum(diff * diff, axis=1, keepdims=True) * inv
            out = out + diff * lax.rsqrt(var + EPS)
        return out

    def kernel(alpha_ref, x_ref, *refs):
        out_ref = refs[-1]
        (w_c1, b_c1, w_c2, b_c2,
         w_d1, b_d1, w_d2, b_d2, w_d3, b_d3,
         w_u3, b_u3, w_u2, b_u2, w_u1, b_u1,
         w_cu, b_cu, w_cu2, b_cu2,
         m3_0, m4_0, m4_1, m3_1,
         s_0, s_1, u_1, u_2,
         a_d2, a_d3, a_u3, a_u2) = refs[:-1]

        a0 = alpha_ref[0]
        a1 = alpha_ref[1]
        a2 = alpha_ref[2]
        a3 = alpha_ref[3]

        x0 = x_ref[0]                                                    # (C, B*P0) f32

        # ---- outermost down: conv1 (3x3 s1) -> prelu -> conv2 (4x4 s2) ----
        h = wmm(w_c1, roll_taps(x0, m3_0, off3_0)) + b_c1[...]           # (ngf, B*P0)
        z = wmm(w_c2, roll_taps(_prelu(h, a0), m4_0, off4_0))
        d0 = per_sample_mm(z.astype(BF16), s_0, P0) + b_c2[...]          # (ngf, B*P1)

        # ---- block1 down: prelu -> 4x4 s2 -> instance norm ----
        z = wmm(w_d1, roll_taps(_prelu(d0, a1), m4_1, off4_1))
        d1 = inorm(per_sample_mm(z.astype(BF16), s_1, P1) + b_d1[...], P2)   # (2ngf, B*P2)

        # ---- block2 / block3 down (tiny grids: folded per-tap operators) ----
        d2 = inorm(wmm(w_d2, op_taps(_prelu(d1, a2).astype(BF16), a_d2, 16)) + b_d2[...],
                   P3)                                                   # (4ngf, B*P3)
        d3 = inorm(wmm(w_d3, op_taps(_prelu(d2, a3).astype(BF16), a_d3, 16)) + b_d3[...],
                   P4)                                                   # (8ngf, B*P4)

        # ---- block3 up: prelu -> up2+3x3 (folded) -> norm ----
        u3 = inorm(wmm(w_u3, op_taps(_prelu(d3, a3).astype(BF16), a_u3, 9)) + b_u3[...],
                   P3)                                                   # (4ngf, B*P3)

        # ---- block2 up: cat -> prelu -> up2+3x3 (folded) -> norm ----
        t = _prelu(jnp.concatenate([u3, d2], axis=0), a2).astype(BF16)
        u2 = inorm(wmm(w_u2, op_taps(t, a_u2, 9)) + b_u2[...], P2)       # (2ngf, B*P2)

        # ---- block1 up: cat -> prelu -> up2 (0/1 op) -> rolls + 3x3 -> norm ----
        t = _prelu(jnp.concatenate([u2, d1], axis=0), a1).astype(BF16)
        t = per_sample_mm(t, u_2, P2)                                    # (4ngf, B*P1) f32
        u1 = inorm(wmm(w_u1, roll_taps(t, m3_1, off3_1)) + b_u1[...], P1)    # (ngf, B*P1)

        # ---- outermost up: cat -> prelu -> up2 -> conv_up -> prelu -> conv_up2 -> tanh ----
        t = _prelu(jnp.concatenate([u1, d0], axis=0), a0).astype(BF16)
        t = per_sample_mm(t, u_1, P1)                                    # (2ngf, B*P0) f32
        h = wmm(w_cu, roll_taps(t, m3_0, off3_0)) + b_cu[...]            # (ngf, B*P0)
        y = wmm(w_cu2, roll_taps(_prelu(h, a0), m3_0, off3_0)) + b_cu2[...]
        out_ref[0] = jnp.tanh(y)                                         # (input_nc, B*P0)

    return kernel


# ----------------------------------------------------------------------------
# Wrapper: one pallas_call for the whole forward
# ----------------------------------------------------------------------------
def unet_forward(cfg, alphas, params, x_nchw, learn_residual=False):
    B = cfg["B"]
    N, C, H, W = x_nchw.shape
    assert N % B == 0
    G = N // B
    P = H * W
    BP = B * P

    # lanes = sample-major flattened spatial (b*P + p); channels in sublanes
    x = (x_nchw.astype(jnp.float32)
         .reshape(G, B, C, P).transpose(0, 2, 1, 3).reshape(G, C, BP))

    kernel = _build_kernel(cfg)

    in_specs = [
        pl.BlockSpec(memory_space=pltpu.MemorySpace.SMEM),               # PReLU alphas
        pl.BlockSpec((1, C, BP), lambda g: (g, 0, 0)),                   # B samples / step
    ] + [pl.BlockSpec(p.shape, _const_index_map(p.ndim)) for p in params]

    param_bytes = sum(int(np.prod(p.shape)) * p.dtype.itemsize for p in params)
    nbytes = int(x.size * 4 * 2 + param_bytes)

    out = pl.pallas_call(
        kernel,
        out_shape=jax.ShapeDtypeStruct((G, C, BP), jnp.float32),
        grid=(G,),
        in_specs=in_specs,
        out_specs=pl.BlockSpec((1, C, BP), lambda g: (g, 0, 0)),
        compiler_params=pltpu.CompilerParams(
            dimension_semantics=("parallel",),
            vmem_limit_bytes=32 * 1024 * 1024),
        cost_estimate=pl.CostEstimate(
            flops=cfg["flops_per_group"] * G,
            transcendentals=cfg["transcendentals_per_group"] * G,
            bytes_accessed=nbytes),
    )(alphas, x, *params)

    out = out.reshape(G, C, B, P).transpose(0, 2, 1, 3).reshape(N, C, H, W)
    if learn_residual:
        out = jnp.clip(x_nchw + out, -1.0, 1.0)
    return out


# ----------------------------------------------------------------------------
# Pure-JAX reference (mirrors the PyTorch graph op-for-op, HIGHEST precision)
# ----------------------------------------------------------------------------
def _conv_ref(x, w, b, stride, pad):
    y = lax.conv_general_dilated(
        x, w, (stride, stride), ((pad, pad), (pad, pad)),
        dimension_numbers=("NCHW", "OIHW", "NCHW"),
        precision=lax.Precision.HIGHEST)
    return y + b.reshape(1, -1, 1, 1)


def _inorm_nchw(x):
    mean = jnp.mean(x, axis=(2, 3), keepdims=True)
    d = x - mean
    var = jnp.mean(d * d, axis=(2, 3), keepdims=True)
    return d * lax.rsqrt(var + EPS)


def unet_reference(p, x):
    b0, b1, b2, b3 = p["b0"], p["b1"], p["b2"], p["b3"]
    a0, a1, a2, a3 = b0["alpha"][0], b1["alpha"][0], b2["alpha"][0], b3["alpha"][0]
    up2 = lambda t: jnp.repeat(jnp.repeat(t, 2, axis=2), 2, axis=3)

    h = _conv_ref(x, b0["c1_w"], b0["c1_b"], 1, 1)
    d0 = _conv_ref(_prelu(h, a0), b0["c2_w"], b0["c2_b"], 2, 1)
    d1 = _inorm_nchw(_conv_ref(_prelu(d0, a1), b1["down_w"], b1["down_b"], 2, 1))
    d2 = _inorm_nchw(_conv_ref(_prelu(d1, a2), b2["down_w"], b2["down_b"], 2, 1))
    d3 = _inorm_nchw(_conv_ref(_prelu(d2, a3), b3["down_w"], b3["down_b"], 2, 1))
    u3 = _inorm_nchw(_conv_ref(up2(_prelu(d3, a3)), b3["up_w"], b3["up_b"], 1, 1))
    t = _prelu(jnp.concatenate([u3, d2], axis=1), a2)
    u2 = _inorm_nchw(_conv_ref(up2(t), b2["up_w"], b2["up_b"], 1, 1))
    t = _prelu(jnp.concatenate([u2, d1], axis=1), a1)
    u1 = _inorm_nchw(_conv_ref(up2(t), b1["up_w"], b1["up_b"], 1, 1))
    t = _prelu(jnp.concatenate([u1, d0], axis=1), a0)
    h = _conv_ref(up2(t), b0["cu_w"], b0["cu_b"], 1, 1)
    return jnp.tanh(_conv_ref(_prelu(h, a0), b0["cu2_w"], b0["cu2_b"], 1, 1))


# ----------------------------------------------------------------------------
# Deterministic parameter initialization (PyTorch Conv2d default-style uniform)
# ----------------------------------------------------------------------------
def _conv_init(key, cout, cin, kh, kw):
    kw_, kb_ = jax.random.split(key)
    bound = 1.0 / (cin * kh * kw) ** 0.5
    w = jax.random.uniform(kw_, (cout, cin, kh, kw), jnp.float32, -bound, bound)
    b = jax.random.uniform(kb_, (cout,), jnp.float32, -bound, bound)
    return w, b


def init_params(key, input_nc=4, ngf=8):
    ks = jax.random.split(key, 10)
    C = input_nc
    p = {}
    c1w, c1b = _conv_init(ks[0], ngf, C, 3, 3)
    c2w, c2b = _conv_init(ks[1], ngf, ngf, 4, 4)
    cuw, cub = _conv_init(ks[2], ngf, 2 * ngf, 3, 3)
    cu2w, cu2b = _conv_init(ks[3], C, ngf, 3, 3)
    p["b0"] = dict(c1_w=c1w, c1_b=c1b, c2_w=c2w, c2_b=c2b, cu_w=cuw, cu_b=cub,
                   cu2_w=cu2w, cu2_b=cu2b, alpha=jnp.full((1,), 0.25, jnp.float32))
    dw, db = _conv_init(ks[4], 2 * ngf, ngf, 4, 4)
    uw, ub = _conv_init(ks[5], ngf, 4 * ngf, 3, 3)
    p["b1"] = dict(down_w=dw, down_b=db, up_w=uw, up_b=ub,
                   alpha=jnp.full((1,), 0.25, jnp.float32))
    dw, db = _conv_init(ks[6], 4 * ngf, 2 * ngf, 4, 4)
    uw, ub = _conv_init(ks[7], 2 * ngf, 8 * ngf, 3, 3)
    p["b2"] = dict(down_w=dw, down_b=db, up_w=uw, up_b=ub,
                   alpha=jnp.full((1,), 0.25, jnp.float32))
    dw, db = _conv_init(ks[8], 8 * ngf, 4 * ngf, 4, 4)
    uw, ub = _conv_init(ks[9], 4 * ngf, 8 * ngf, 3, 3)
    p["b3"] = dict(down_w=dw, down_b=db, up_w=uw, up_b=ub,
                   alpha=jnp.full((1,), 0.25, jnp.float32))
    return p


if __name__ == "__main__":
    key = jax.random.PRNGKey(0)
    pkey, xkey = jax.random.split(key)
    input_nc, ngf, H, W = 4, 8, 16, 16
    params_t = init_params(pkey, input_nc=input_nc, ngf=ngf)
    x = jax.random.normal(xkey, (2, input_nc, H, W), jnp.float32)   # NCHW like PyTorch

    B = x.shape[0]                                   # whole batch in the matmul lane dim
    cfg = make_config(input_nc=input_nc, ngf=ngf, H=H, W=W, B=B,
                      roll_sign=_detect_roll_sign())
    alphas, plist = pack_params(params_t, cfg)

    fwd = jax.jit(functools.partial(unet_forward, cfg, alphas, plist))
    out = fwd(x)
    jax.block_until_ready(out)

    ref = unet_reference(params_t, x)                # f32 HIGHEST-precision reference
    assert out.shape == x.shape
    assert bool(jnp.all(jnp.isfinite(out)))
    # kernel runs with bf16 MXU operands (f32 accumulate); 0/1 operators/masks are exact,
    # so the only divergence from the HIGHEST-precision reference is bf16 operand rounding.
    err = float(jnp.max(jnp.abs(out - ref)))
    assert err < 3e-2, err
    print("KERNEL_OK")
</pallas_src>

<mosaic_0001>
module attributes {stable_mosaic.version = 11 : i64} {
  func.func @probe(%arg0: memref<8x128xf32, #tpu.memory_space<vmem>>, %arg1: memref<8x128xf32, #tpu.memory_space<vmem>>) attributes {dimension_semantics = [], scalar_prefetch = 0 : i64, scratch_operands = 0 : i64, tpu.core_type = #tpu.core_type<tc>} {
    %c0 = arith.constant 0 : index
    %c0_0 = arith.constant 0 : index
    %0 = vector.load %arg0[%c0, %c0_0] : memref<8x128xf32, #tpu.memory_space<vmem>>, vector<8x128xf32>
    %c1_i32 = arith.constant 1 : i32
    %1 = tpu.dynamic_rotate %0 by %c1_i32 dim 1 : vector<8x128xf32>, i32 -> vector<8x128xf32>
    %c0_1 = arith.constant 0 : index
    %c0_2 = arith.constant 0 : index
    %2 = vector.load %arg1[%c0_1, %c0_2] : memref<8x128xf32, #tpu.memory_space<vmem>>, vector<8x128xf32>
    tpu.vector_store %arg1[%c0_1, %c0_2], %1 {strides = array<i32>} : memref<8x128xf32, #tpu.memory_space<vmem>>, vector<8x128xf32>,
    return
  }
}

</mosaic_0001>

<llo_original>
// kernel: tpu_custom_call.1
$region0: #{tpu_custom_call.1}
  #allocation0 [shape = 'u32[]', space=smem, size = 0x4, offset = 0x4, fixed_abs, tag = 'smem constant byte address 0x4 - core index']
  #allocation1 [shape = 'u32[72,128]{1,0:T(1,128)}', space=vmem, size = 0x9000, scoped, tag = 'internal scratch']
  %s0 = inlined_call_operand.hbm [shape: f32[8,128], index: 0, kind: input, shape index: {}]
  %s1 = inlined_call_operand.hbm [shape: f32[8,128], index: 1, kind: output, shape index: {}]
  %s2 = sld [smem:[#allocation0]]
  $region18: #{tpu_custom_call.1} parent=0
    _
  %s4 = ssub.s32 1, %s2
  %s5 = scalar_select 0, %s4, %s2
  $region1: #{tpu_custom_call.1} parent=0
    #allocation2 [shape = 'u8[4096]{0}', space=vmem, size = 0x1000, scoped, tag = 'input window, operand 0, single buffered']
    #allocation3 [shape = 's32[1]{0}', space=sflag, size = 0x4, scoped, tag = 'scoped memory for tpu_custom_call.1']
    #allocation4 [shape = 's32[1]{0}', space=sflag, size = 0x4, scoped, tag = 'scoped memory for tpu_custom_call.1']
    #allocation5 [shape = 'u8[4096]{0}', space=vmem, size = 0x1000, scoped, tag = 'output window, operand 0, single buffered']
    %6 = vsyncpa [#allocation3], 0
    %7 = vsyncpa [#allocation4], 0
    // Predicated region
    $region2: #{tpu_custom_call.1} parent=1 // pred_check
      _
    $region3: #{tpu_custom_call.1} parent=1 // pred_check_branch
      %9 = sbr.rel (0) target = $region5
    $region4: #{tpu_custom_call.1} parent=1 // pred_region
      %11 = vsyncadd [#allocation3], 0
      %s13 = sshll.u32 %s0, 4
      %s14 = int_to_ptr.hbm [resolvable:$true] %s13
      %s15 = sshll.u32 [#allocation2], 4
      %s16 = int_to_ptr.vmem [resolvable:$true] %s15
      %18 = dma.hbm_to_vmem [thread:$0]  %s14, 128, %s16, [#allocation3]
    $region5: #{tpu_custom_call.1} parent=1 // pred_fallthru
      _
    // Predicated region
    $region6: #{tpu_custom_call.1} parent=1 // pred_check
      _
    $region7: #{tpu_custom_call.1} parent=1 // pred_check_branch
      %20 = sbr.rel (0) target = $region9
    $region8: #{tpu_custom_call.1} parent=1 // pred_region
      %22 = dma.done [#allocation3], 128
    $region9: #{tpu_custom_call.1} parent=1 // pred_fallthru
      _
    %v23 = vld [vmem:[#allocation2] sm:$0xff]
    %24 = vrot.lane.b32.xlu0 %v23, 1
    %v25 = vpop.permute.xlu0 %24
    %26 = vst [vmem:[#allocation5] sm:$0xff] %v25
    // Predicated region
    $region10: #{tpu_custom_call.1} parent=1 // pred_check
      _
    $region11: #{tpu_custom_call.1} parent=1 // pred_check_branch
      %28 = sbr.rel (0) target = $region13
    $region12: #{tpu_custom_call.1} parent=1 // pred_region
      %30 = vsyncadd [#allocation4], 0
      %s32 = sshll.u32 [#allocation5], 4
      %s33 = int_to_ptr.vmem [resolvable:$true] %s32
      %s34 = sshll.u32 %s1, 4
      %s35 = int_to_ptr.hbm [resolvable:$true] %s34
      %37 = dma.vmem_to_hbm [thread:$0]  %s33, 128, %s35, [#allocation4]
    $region13: #{tpu_custom_call.1} parent=1 // pred_fallthru
      _
    // Predicated region
    $region14: #{tpu_custom_call.1} parent=1 // pred_check
      _
    $region15: #{tpu_custom_call.1} parent=1 // pred_check_branch
      %39 = sbr.rel (0) target = $region17
    $region16: #{tpu_custom_call.1} parent=1 // pred_region
      %41 = dma.done [#allocation4], 128
    $region17: #{tpu_custom_call.1} parent=1 // pred_fallthru
      _
    %42 = vsyncpa [#allocation3], 1
    %43 = vsyncpa [#allocation4], 1

</llo_original>
